<compile_context>
chip_gen: v5e
topology: v5e:2x2
jax: 0.10.0
libtpu: 0.0.40
codegen_flags: <defaults>
</compile_context>

<pallas_src>
import math

import jax
import jax.numpy as jnp
import numpy as np
from jax.experimental import pallas as pl
from jax.experimental.pallas import tpu as pltpu

# ----- small, forward-consistent shapes -----
B = 2          # batch
S = 8          # sequence length
H = 32         # hidden_size
NH = 4         # attention heads
DH = H // NH   # head dim
F = 64         # ffn intermediate
N_TARGETS = 6  # len(CFG.target_cols)
OUT_PAD = 128  # lane-dense padded width
VOCAB = 50
LN_EPS = 1e-7

BS = B * S            # 16  (activation slab rows)
BHS = B * NH * S      # 64  (packed (batch, head, key) columns)
OUT_ROWS = BS + B     # 18  (hidden rows + logits rows in the packed output)


def _round8(n):
    return (n + 7) // 8 * 8


# ---- packed parameter slab layout: every entry starts on an 8-row (sublane) boundary ----
_ENTRIES = [
    ("wqkv", H, 3 * H), ("bqkv", 1, 3 * H),
    ("wo", H, H), ("bo", 1, H),
    ("ln1g", 1, H), ("ln1b", 1, H),
    ("w1", H, F), ("b1", 1, F),
    ("w2", F, H), ("b2", 1, H),
    ("ln2g", 1, H), ("ln2b", 1, H),
    ("fcw", H, OUT_PAD), ("fcb", 1, OUT_PAD),
    ("gmat", BHS, BS),        # one-hot (batch,head,key)->(batch,key) row replication
    ("bm", BHS, H),           # head column mask
    ("batch_blk", BS, BHS),   # cross-batch block-diagonal mask
    ("head_ones", BHS, BHS),  # same-head ones (softmax denominator matmul)
    ("expand", BS, BHS),      # (batch,key) -> packed-column expansion (= gmat^T)
    ("pool_sel", B, BS),      # batch selector for mean pooling
]

OFF = {}
_r = 0
for _name, _nr, _nc in _ENTRIES:
    OFF[_name] = (_r, _nr, _nc)
    _r = _round8(_r + _nr)
P_ROWS = _r   # 496


def _recip(d):
    # approx reciprocal lands on the EUP slot; one Newton step restores ~f32 accuracy.
    r = pl.reciprocal(d, approx=True)
    return r * (2.0 - d * r)


def _layer_norm(x, g, b):
    mu = jnp.mean(x, axis=-1, keepdims=True)
    var = jnp.mean((x - mu) ** 2, axis=-1, keepdims=True)
    return (x - mu) * jax.lax.rsqrt(var + LN_EPS) * g + b


def fb3_kernel(x_ref, mask_ref, p_ref, out_ref):
    def P(name):
        r, nr, nc = OFF[name]
        return p_ref[r:r + nr, 0:nc]

    x = x_ref[...]        # (B*S, H) activation slab
    mask = mask_ref[...]  # (1, B*S) padding mask

    # deterministic output (unused lanes of the hidden rows stay zero)
    out_ref[...] = jnp.zeros_like(out_ref)

    # ---- fused QKV projection (1/sqrt(DH) pre-folded into Q weight/bias at pack time) ----
    qkv = jnp.dot(x, P("wqkv"), preferred_element_type=jnp.float32) + P("bqkv")
    q = qkv[:, 0:H]
    k = qkv[:, H:2 * H]
    v = qkv[:, 2 * H:3 * H]

    # ---- block-masked K/V slabs over (batch, head): one replication matmul + mask each ----
    gmat = P("gmat")                  # (B*NH*S, B*S)
    bm = P("bm")                      # (B*NH*S, H)
    k_slab = jnp.dot(gmat, k, preferred_element_type=jnp.float32) * bm
    v_slab = jnp.dot(gmat, v, preferred_element_type=jnp.float32) * bm

    # ---- all (batch, head) scores in one lane-dense (B*S, B*NH*S) block ----
    s_all = jnp.dot(q, k_slab.T, preferred_element_type=jnp.float32)

    # multiplicative post-exp mask: runtime key-padding expanded to column layout by one tiny
    # matmul, times the constant cross-batch block-diagonal mask (equivalent to the additive
    # -1e9 bias: exp underflows to exactly 0 in f32).
    mask_cols = jnp.dot(mask, P("expand"), preferred_element_type=jnp.float32)  # (1, B*NH*S)
    pmask = P("batch_blk") * mask_cols                                          # (B*S, B*NH*S)

    # one softmax stream; the shared row max cancels exactly in p/denom per (batch, head) block
    row_max = jnp.max(s_all, axis=-1, keepdims=True)
    p = jnp.exp(s_all - row_max) * pmask
    # per-(batch,head) denominators via a same-head-ones matmul; nonzero in every column
    # (cross-batch columns reuse the own-batch sum), so no 0/0 where p is already zero.
    denom = jnp.dot(p, P("head_ones"), preferred_element_type=jnp.float32)
    p = p * _recip(denom)

    ctx = jnp.dot(p, v_slab, preferred_element_type=jnp.float32)   # (B*S, H), heads in place
    o = jnp.dot(ctx, P("wo"), preferred_element_type=jnp.float32) + P("bo")

    # ---- residual + LN1, FFN, residual + LN2 on the full slab ----
    h1 = _layer_norm(x + o, P("ln1g"), P("ln1b"))
    f = jnp.dot(h1, P("w1"), preferred_element_type=jnp.float32) + P("b1")
    f = jax.nn.gelu(f, approximate=True)
    f = jnp.dot(f, P("w2"), preferred_element_type=jnp.float32) + P("b2")
    h2 = _layer_norm(h1 + f, P("ln2g"), P("ln2b"))

    # ---- MeanPooling: one block-diagonal matmul; masked counts via a lane reduce ----
    pool_mat = P("pool_sel") * mask                                   # (B, B*S)
    sum_emb = jnp.dot(pool_mat, h2, preferred_element_type=jnp.float32)
    sum_mask = jnp.maximum(jnp.sum(pool_mat, axis=-1, keepdims=True), 1e-9)
    feature = sum_emb * _recip(sum_mask)

    # ---- fc head: Linear(H, 6), zero-padded to 128 lanes ----
    logits = jnp.dot(feature, P("fcw"), preferred_element_type=jnp.float32) + P("fcb")

    # single packed output: rows [0, B*S) lanes [0, H) = last_hidden, rows [B*S, B*S+B) = logits
    out_ref[0:BS, 0:H] = h2
    out_ref[BS:BS + B, :] = logits


def pack_params(params):
    """One-time pack: QKV fusion, 1/sqrt(DH) fold, fc padding, all constants, one f32 slab."""
    scale = 1.0 / math.sqrt(DH)

    rows = np.arange(BHS)
    b_r = rows // (NH * S)
    h_r = (rows % (NH * S)) // S
    k_r = rows % S
    cols_b = rows // (NH * S)
    cols_k = rows % S

    gmat = (np.arange(BS)[None, :] == (b_r * S + k_r)[:, None]).astype(np.float32)
    bm = (np.arange(H)[None, :] // DH == h_r[:, None]).astype(np.float32)
    batch_blk = (np.arange(BS)[:, None] // S == cols_b[None, :]).astype(np.float32)
    head_ones = (h_r[:, None] == h_r[None, :]).astype(np.float32)
    expand = (np.arange(BS)[:, None] == (cols_b * S + cols_k)[None, :]).astype(np.float32)
    pool_sel = (np.arange(B)[:, None] == np.arange(BS)[None, :] // S).astype(np.float32)

    fcw_pad = jnp.zeros((H, OUT_PAD), jnp.float32).at[:, :N_TARGETS].set(params["fcw"])
    fcb_pad = jnp.zeros((1, OUT_PAD), jnp.float32).at[:, :N_TARGETS].set(params["fcb"])

    vals = {
        "wqkv": jnp.concatenate([params["wq"] * scale, params["wk"], params["wv"]], axis=1),
        "bqkv": jnp.concatenate([params["bq"] * scale, params["bk"], params["bv"]], axis=1),
        "wo": params["wo"], "bo": params["bo"],
        "ln1g": params["ln1g"], "ln1b": params["ln1b"],
        "w1": params["w1"], "b1": params["b1"],
        "w2": params["w2"], "b2": params["b2"],
        "ln2g": params["ln2g"], "ln2b": params["ln2b"],
        "fcw": fcw_pad, "fcb": fcb_pad,
        "gmat": jnp.asarray(gmat), "bm": jnp.asarray(bm),
        "batch_blk": jnp.asarray(batch_blk), "head_ones": jnp.asarray(head_ones),
        "expand": jnp.asarray(expand), "pool_sel": jnp.asarray(pool_sel),
    }

    slab = jnp.zeros((P_ROWS, OUT_PAD), jnp.float32)
    for name, (r, nr, nc) in OFF.items():
        slab = slab.at[r:r + nr, 0:nc].set(vals[name])
    return slab


def fb3_forward(x_emb, attention_mask, packed_slab):
    """x_emb: (B,S,H) f32; attention_mask: (B,S) f32 -> (logits (B,6), last_hidden (B,S,H))."""
    x_flat = x_emb.reshape(BS, H)
    mask_flat = attention_mask.reshape(1, BS)
    vmem = pl.BlockSpec(memory_space=pltpu.MemorySpace.VMEM)

    out = pl.pallas_call(
        fb3_kernel,
        out_shape=jax.ShapeDtypeStruct((OUT_ROWS, OUT_PAD), jnp.float32),
        in_specs=[vmem, vmem, vmem],
        out_specs=vmem,
    )(x_flat, mask_flat, packed_slab)

    logits = out[BS:BS + B, :N_TARGETS]
    last_hidden = out[0:BS, 0:H].reshape(B, S, H)
    return logits, last_hidden


# ---------------- pure-JAX reference (mirrors the PyTorch semantics) ----------------
def fb3_reference(x_emb, mask, p):
    x = x_emb
    q = x @ p["wq"] + p["bq"]
    k = x @ p["wk"] + p["bk"]
    v = x @ p["wv"] + p["bv"]

    def split(t):  # (B,S,H) -> (B,NH,S,DH)
        return t.reshape(B, S, NH, DH).transpose(0, 2, 1, 3)

    qh, kh, vh = split(q), split(k), split(v)
    s = jnp.einsum("bhqd,bhkd->bhqk", qh, kh) / math.sqrt(DH)
    s = s + (1.0 - mask)[:, None, None, :] * (-1e9)
    pattn = jax.nn.softmax(s, axis=-1)
    o = jnp.einsum("bhqk,bhkd->bhqd", pattn, vh).transpose(0, 2, 1, 3).reshape(B, S, H)
    o = o @ p["wo"] + p["bo"]

    def ln(t, g, bta):
        mu = t.mean(-1, keepdims=True)
        var = ((t - mu) ** 2).mean(-1, keepdims=True)
        return (t - mu) * jax.lax.rsqrt(var + LN_EPS) * g + bta

    h1 = ln(x + o, p["ln1g"], p["ln1b"])
    f = jax.nn.gelu(h1 @ p["w1"] + p["b1"], approximate=True) @ p["w2"] + p["b2"]
    h2 = ln(h1 + f, p["ln2g"], p["ln2b"])

    # MeanPooling
    m = mask[:, :, None]
    feature = (h2 * m).sum(1) / jnp.clip(m.sum(1), 1e-9)
    logits = feature @ p["fcw"] + p["fcb"]
    return logits, h2


def init_params(key):
    ks = jax.random.split(key, 12)
    std = 0.02
    return {
        "wq": jax.random.normal(ks[0], (H, H), jnp.float32) * std,
        "bq": jnp.zeros((1, H), jnp.float32),
        "wk": jax.random.normal(ks[1], (H, H), jnp.float32) * std,
        "bk": jnp.zeros((1, H), jnp.float32),
        "wv": jax.random.normal(ks[2], (H, H), jnp.float32) * std,
        "bv": jnp.zeros((1, H), jnp.float32),
        "wo": jax.random.normal(ks[3], (H, H), jnp.float32) * std,
        "bo": jnp.zeros((1, H), jnp.float32),
        "ln1g": jnp.ones((1, H), jnp.float32),
        "ln1b": jnp.zeros((1, H), jnp.float32),
        "w1": jax.random.normal(ks[4], (H, F), jnp.float32) * std,
        "b1": jnp.zeros((1, F), jnp.float32),
        "w2": jax.random.normal(ks[5], (F, H), jnp.float32) * std,
        "b2": jnp.zeros((1, H), jnp.float32),
        "ln2g": jnp.ones((1, H), jnp.float32),
        "ln2b": jnp.zeros((1, H), jnp.float32),
        "fcw": jax.random.normal(ks[6], (H, N_TARGETS), jnp.float32) * std,
        "fcb": jnp.zeros((1, N_TARGETS), jnp.float32),
        "emb": jax.random.normal(ks[7], (VOCAB, H), jnp.float32) * std,
        "pos": jax.random.normal(ks[8], (S, H), jnp.float32) * std,
    }


if __name__ == "__main__":
    key = jax.random.PRNGKey(0)
    kp, kid = jax.random.split(key)
    params = init_params(kp)
    packed_slab = pack_params(params)   # one-time pack into a single (496, 128) f32 slab

    # deterministic example inputs: token ids + padding mask (second sequence padded)
    input_ids = jax.random.randint(kid, (B, S), 0, VOCAB)
    attention_mask = jnp.array(
        [[1] * S,
         [1] * 5 + [0] * (S - 5)], dtype=jnp.float32)

    # embedding lookup is glue (gather) done in plain JAX
    x_emb = (params["emb"][input_ids] + params["pos"][None, :, :]).astype(jnp.float32)

    logits, last_hidden = fb3_forward(x_emb, attention_mask, packed_slab)
    jax.block_until_ready((logits, last_hidden))

    ref_logits, ref_hidden = fb3_reference(x_emb, attention_mask, params)
    np.testing.assert_allclose(np.asarray(last_hidden), np.asarray(ref_hidden), rtol=1e-4, atol=1e-4)
    np.testing.assert_allclose(np.asarray(logits), np.asarray(ref_logits), rtol=1e-4, atol=1e-4)

    assert logits.shape == (B, N_TARGETS) and last_hidden.shape == (B, S, H)
    print("KERNEL_OK")
</pallas_src>

<mosaic_0001>
module attributes {stable_mosaic.version = 11 : i64} {
  func.func @fb3_kernel(%arg0: memref<16x32xf32, #tpu.memory_space<vmem>>, %arg1: memref<1x16xf32, #tpu.memory_space<vmem>>, %arg2: memref<496x128xf32, #tpu.memory_space<vmem>>, %arg3: memref<18x128xf32, #tpu.memory_space<vmem>>) attributes {dimension_semantics = [], scalar_prefetch = 0 : i64, scratch_operands = 0 : i64, tpu.core_type = #tpu.core_type<tc>} {
    %c0 = arith.constant 0 : index
    %c0_0 = arith.constant 0 : index
    %0 = vector.load %arg0[%c0, %c0_0] : memref<16x32xf32, #tpu.memory_space<vmem>>, vector<16x32xf32>
    %c0_1 = arith.constant 0 : index
    %c0_2 = arith.constant 0 : index
    %1 = vector.load %arg1[%c0_1, %c0_2] : memref<1x16xf32, #tpu.memory_space<vmem>>, vector<1x16xf32>
    %cst = arith.constant 0.000000e+00 : f32
    %2 = vector.broadcast %cst : f32 to vector<18x128xf32>
    %c0_3 = arith.constant 0 : index
    %c0_4 = arith.constant 0 : index
    %3 = vector.load %arg3[%c0_3, %c0_4] : memref<18x128xf32, #tpu.memory_space<vmem>>, vector<18x128xf32>
    tpu.vector_store %arg3[%c0_3, %c0_4], %2 {strides = array<i32>} : memref<18x128xf32, #tpu.memory_space<vmem>>, vector<18x128xf32>,
    %c0_5 = arith.constant 0 : index
    %c0_6 = arith.constant 0 : index
    %4 = vector.load %arg2[%c0_5, %c0_6] : memref<496x128xf32, #tpu.memory_space<vmem>>, vector<32x96xf32>
    %cst_7 = arith.constant dense<0.000000e+00> : vector<16x96xf32>
    %5 = tpu.matmul %0, %4, %cst_7 {dimension_numbers = #tpu.dot_dimension_numbers<[1], [0], [0], [1], [0, 0, 1, 1], [], []>} : vector<16x32xf32>, vector<32x96xf32>, vector<16x96xf32> -> vector<16x96xf32>
    %c32 = arith.constant 32 : index
    %c0_8 = arith.constant 0 : index
    %6 = vector.load %arg2[%c32, %c0_8] : memref<496x128xf32, #tpu.memory_space<vmem>>, vector<1x96xf32>
    %7 = vector.broadcast %6 : vector<1x96xf32> to vector<16x96xf32>
    %8 = arith.addf %5, %7 : vector<16x96xf32>
    %9 = vector.extract_strided_slice %8 {offsets = [0, 0], sizes = [16, 32], strides = [1, 1]} : vector<16x96xf32> to vector<16x32xf32>
    %10 = vector.extract_strided_slice %8 {offsets = [0, 32], sizes = [16, 32], strides = [1, 1]} : vector<16x96xf32> to vector<16x32xf32>
    %11 = vector.extract_strided_slice %8 {offsets = [0, 64], sizes = [16, 32], strides = [1, 1]} : vector<16x96xf32> to vector<16x32xf32>
    %c264 = arith.constant 264 : index
    %c0_9 = arith.constant 0 : index
    %12 = vector.load %arg2[%c264, %c0_9] : memref<496x128xf32, #tpu.memory_space<vmem>>, vector<64x16xf32>
    %c328 = arith.constant 328 : index
    %c0_10 = arith.constant 0 : index
    %13 = vector.load %arg2[%c328, %c0_10] : memref<496x128xf32, #tpu.memory_space<vmem>>, vector<64x32xf32>
    %cst_11 = arith.constant dense<0.000000e+00> : vector<64x32xf32>
    %14 = tpu.matmul %12, %10, %cst_11 {dimension_numbers = #tpu.dot_dimension_numbers<[1], [0], [0], [1], [0, 0, 1, 1], [], []>} : vector<64x16xf32>, vector<16x32xf32>, vector<64x32xf32> -> vector<64x32xf32>
    %15 = arith.mulf %14, %13 : vector<64x32xf32>
    %cst_12 = arith.constant dense<0.000000e+00> : vector<64x32xf32>
    %16 = tpu.matmul %12, %11, %cst_12 {dimension_numbers = #tpu.dot_dimension_numbers<[1], [0], [0], [1], [0, 0, 1, 1], [], []>} : vector<64x16xf32>, vector<16x32xf32>, vector<64x32xf32> -> vector<64x32xf32>
    %17 = arith.mulf %16, %13 : vector<64x32xf32>
    %18 = tpu.transpose %15, [1, 0] : vector<64x32xf32> -> vector<32x64xf32>
    %cst_13 = arith.constant dense<0.000000e+00> : vector<16x64xf32>
    %19 = tpu.matmul %9, %18, %cst_13 {dimension_numbers = #tpu.dot_dimension_numbers<[1], [0], [0], [1], [0, 0, 1, 1], [], []>} : vector<16x32xf32>, vector<32x64xf32>, vector<16x64xf32> -> vector<16x64xf32>
    %c472 = arith.constant 472 : index
    %c0_14 = arith.constant 0 : index
    %20 = vector.load %arg2[%c472, %c0_14] : memref<496x128xf32, #tpu.memory_space<vmem>>, vector<16x64xf32>
    %cst_15 = arith.constant dense<0.000000e+00> : vector<1x64xf32>
    %21 = tpu.matmul %1, %20, %cst_15 {dimension_numbers = #tpu.dot_dimension_numbers<[1], [0], [0], [1], [0, 0, 1, 1], [], []>} : vector<1x16xf32>, vector<16x64xf32>, vector<1x64xf32> -> vector<1x64xf32>
    %c392 = arith.constant 392 : index
    %c0_16 = arith.constant 0 : index
    %22 = vector.load %arg2[%c392, %c0_16] : memref<496x128xf32, #tpu.memory_space<vmem>>, vector<16x64xf32>
    %23 = vector.broadcast %21 : vector<1x64xf32> to vector<16x64xf32>
    %24 = arith.mulf %22, %23 : vector<16x64xf32>
    %cst_17 = arith.constant dense<0xFF800000> : vector<16xf32>
    %25 = vector.multi_reduction <maximumf>, %19, %cst_17 [1] : vector<16x64xf32> to vector<16xf32>
    %26 = vector.shape_cast %25 : vector<16xf32> to vector<16x1xf32>
    %27 = vector.broadcast %26 : vector<16x1xf32> to vector<16x64xf32>
    %28 = arith.subf %19, %27 : vector<16x64xf32>
    %29 = math.exp %28 : vector<16x64xf32>
    %30 = arith.mulf %29, %24 : vector<16x64xf32>
    %c408 = arith.constant 408 : index
    %c0_18 = arith.constant 0 : index
    %31 = vector.load %arg2[%c408, %c0_18] : memref<496x128xf32, #tpu.memory_space<vmem>>, vector<64x64xf32>
    %cst_19 = arith.constant dense<0.000000e+00> : vector<16x64xf32>
    %32 = tpu.matmul %30, %31, %cst_19 {dimension_numbers = #tpu.dot_dimension_numbers<[1], [0], [0], [1], [0, 0, 1, 1], [], []>} : vector<16x64xf32>, vector<64x64xf32>, vector<16x64xf32> -> vector<16x64xf32>
    %33 = tpu.reciprocal %32 {approx = true} : vector<16x64xf32> -> vector<16x64xf32>
    %34 = arith.mulf %32, %33 : vector<16x64xf32>
    %cst_20 = arith.constant 2.000000e+00 : f32
    %35 = vector.broadcast %cst_20 : f32 to vector<16x64xf32>
    %36 = arith.subf %35, %34 : vector<16x64xf32>
    %37 = arith.mulf %33, %36 : vector<16x64xf32>
    %38 = arith.mulf %30, %37 : vector<16x64xf32>
    %cst_21 = arith.constant dense<0.000000e+00> : vector<16x32xf32>
    %39 = tpu.matmul %38, %17, %cst_21 {dimension_numbers = #tpu.dot_dimension_numbers<[1], [0], [0], [1], [0, 0, 1, 1], [], []>} : vector<16x64xf32>, vector<64x32xf32>, vector<16x32xf32> -> vector<16x32xf32>
    %c40 = arith.constant 40 : index
    %c0_22 = arith.constant 0 : index
    %40 = vector.load %arg2[%c40, %c0_22] : memref<496x128xf32, #tpu.memory_space<vmem>>, vector<32x32xf32>
    %cst_23 = arith.constant dense<0.000000e+00> : vector<16x32xf32>
    %41 = tpu.matmul %39, %40, %cst_23 {dimension_numbers = #tpu.dot_dimension_numbers<[1], [0], [0], [1], [0, 0, 1, 1], [], []>} : vector<16x32xf32>, vector<32x32xf32>, vector<16x32xf32> -> vector<16x32xf32>
    %c72 = arith.constant 72 : index
    %c0_24 = arith.constant 0 : index
    %42 = vector.load %arg2[%c72, %c0_24] : memref<496x128xf32, #tpu.memory_space<vmem>>, vector<1x32xf32>
    %43 = vector.broadcast %42 : vector<1x32xf32> to vector<16x32xf32>
    %44 = arith.addf %41, %43 : vector<16x32xf32>
    %45 = arith.addf %0, %44 : vector<16x32xf32>
    %c80 = arith.constant 80 : index
    %c0_25 = arith.constant 0 : index
    %46 = vector.load %arg2[%c80, %c0_25] : memref<496x128xf32, #tpu.memory_space<vmem>>, vector<1x32xf32>
    %c88 = arith.constant 88 : index
    %c0_26 = arith.constant 0 : index
    %47 = vector.load %arg2[%c88, %c0_26] : memref<496x128xf32, #tpu.memory_space<vmem>>, vector<1x32xf32>
    %cst_27 = arith.constant dense<0.000000e+00> : vector<16xf32>
    %48 = vector.multi_reduction <add>, %45, %cst_27 [1] : vector<16x32xf32> to vector<16xf32>
    %49 = vector.shape_cast %48 : vector<16xf32> to vector<16x1xf32>
    %cst_28 = arith.constant 3.200000e+01 : f32
    %50 = vector.broadcast %cst_28 : f32 to vector<16x1xf32>
    %51 = arith.divf %49, %50 : vector<16x1xf32>
    %52 = vector.broadcast %51 : vector<16x1xf32> to vector<16x32xf32>
    %53 = arith.subf %45, %52 : vector<16x32xf32>
    %54 = arith.mulf %53, %53 : vector<16x32xf32>
    %cst_29 = arith.constant dense<0.000000e+00> : vector<16xf32>
    %55 = vector.multi_reduction <add>, %54, %cst_29 [1] : vector<16x32xf32> to vector<16xf32>
    %56 = vector.shape_cast %55 : vector<16xf32> to vector<16x1xf32>
    %cst_30 = arith.constant 3.200000e+01 : f32
    %57 = vector.broadcast %cst_30 : f32 to vector<16x1xf32>
    %58 = arith.divf %56, %57 : vector<16x1xf32>
    %59 = vector.broadcast %51 : vector<16x1xf32> to vector<16x32xf32>
    %60 = arith.subf %45, %59 : vector<16x32xf32>
    %cst_31 = arith.constant 1.000000e-07 : f32
    %61 = vector.broadcast %cst_31 : f32 to vector<16x1xf32>
    %62 = arith.addf %58, %61 : vector<16x1xf32>
    %63 = math.rsqrt %62 : vector<16x1xf32>
    %64 = vector.broadcast %63 : vector<16x1xf32> to vector<16x32xf32>
    %65 = arith.mulf %60, %64 : vector<16x32xf32>
    %66 = vector.broadcast %46 : vector<1x32xf32> to vector<16x32xf32>
    %67 = arith.mulf %65, %66 : vector<16x32xf32>
    %68 = vector.broadcast %47 : vector<1x32xf32> to vector<16x32xf32>
    %69 = arith.addf %67, %68 : vector<16x32xf32>
    %c96 = arith.constant 96 : index
    %c0_32 = arith.constant 0 : index
    %70 = vector.load %arg2[%c96, %c0_32] : memref<496x128xf32, #tpu.memory_space<vmem>>, vector<32x64xf32>
    %cst_33 = arith.constant dense<0.000000e+00> : vector<16x64xf32>
    %71 = tpu.matmul %69, %70, %cst_33 {dimension_numbers = #tpu.dot_dimension_numbers<[1], [0], [0], [1], [0, 0, 1, 1], [], []>} : vector<16x32xf32>, vector<32x64xf32>, vector<16x64xf32> -> vector<16x64xf32>
    %c128 = arith.constant 128 : index
    %c0_34 = arith.constant 0 : index
    %72 = vector.load %arg2[%c128, %c0_34] : memref<496x128xf32, #tpu.memory_space<vmem>>, vector<1x64xf32>
    %73 = vector.broadcast %72 : vector<1x64xf32> to vector<16x64xf32>
    %74 = arith.addf %71, %73 : vector<16x64xf32>
    %75 = arith.mulf %74, %74 : vector<16x64xf32>
    %76 = arith.mulf %74, %75 : vector<16x64xf32>
    %cst_35 = arith.constant 4.471500e-02 : f32
    %77 = vector.broadcast %cst_35 : f32 to vector<16x64xf32>
    %78 = arith.mulf %77, %76 : vector<16x64xf32>
    %79 = arith.addf %74, %78 : vector<16x64xf32>
    %cst_36 = arith.constant 0.797884583 : f32
    %80 = vector.broadcast %cst_36 : f32 to vector<16x64xf32>
    %81 = arith.mulf %80, %79 : vector<16x64xf32>
    %82 = math.tanh %81 : vector<16x64xf32>
    %cst_37 = arith.constant 1.000000e+00 : f32
    %83 = vector.broadcast %cst_37 : f32 to vector<16x64xf32>
    %84 = arith.addf %83, %82 : vector<16x64xf32>
    %cst_38 = arith.constant 5.000000e-01 : f32
    %85 = vector.broadcast %cst_38 : f32 to vector<16x64xf32>
    %86 = arith.mulf %85, %84 : vector<16x64xf32>
    %87 = arith.mulf %74, %86 : vector<16x64xf32>
    %c136 = arith.constant 136 : index
    %c0_39 = arith.constant 0 : index
    %88 = vector.load %arg2[%c136, %c0_39] : memref<496x128xf32, #tpu.memory_space<vmem>>, vector<64x32xf32>
    %cst_40 = arith.constant dense<0.000000e+00> : vector<16x32xf32>
    %89 = tpu.matmul %87, %88, %cst_40 {dimension_numbers = #tpu.dot_dimension_numbers<[1], [0], [0], [1], [0, 0, 1, 1], [], []>} : vector<16x64xf32>, vector<64x32xf32>, vector<16x32xf32> -> vector<16x32xf32>
    %c200 = arith.constant 200 : index
    %c0_41 = arith.constant 0 : index
    %90 = vector.load %arg2[%c200, %c0_41] : memref<496x128xf32, #tpu.memory_space<vmem>>, vector<1x32xf32>
    %91 = vector.broadcast %90 : vector<1x32xf32> to vector<16x32xf32>
    %92 = arith.addf %89, %91 : vector<16x32xf32>
    %93 = arith.addf %69, %92 : vector<16x32xf32>
    %c208 = arith.constant 208 : index
    %c0_42 = arith.constant 0 : index
    %94 = vector.load %arg2[%c208, %c0_42] : memref<496x128xf32, #tpu.memory_space<vmem>>, vector<1x32xf32>
    %c216 = arith.constant 216 : index
    %c0_43 = arith.constant 0 : index
    %95 = vector.load %arg2[%c216, %c0_43] : memref<496x128xf32, #tpu.memory_space<vmem>>, vector<1x32xf32>
    %cst_44 = arith.constant dense<0.000000e+00> : vector<16xf32>
    %96 = vector.multi_reduction <add>, %93, %cst_44 [1] : vector<16x32xf32> to vector<16xf32>
    %97 = vector.shape_cast %96 : vector<16xf32> to vector<16x1xf32>
    %cst_45 = arith.constant 3.200000e+01 : f32
    %98 = vector.broadcast %cst_45 : f32 to vector<16x1xf32>
    %99 = arith.divf %97, %98 : vector<16x1xf32>
    %100 = vector.broadcast %99 : vector<16x1xf32> to vector<16x32xf32>
    %101 = arith.subf %93, %100 : vector<16x32xf32>
    %102 = arith.mulf %101, %101 : vector<16x32xf32>
    %cst_46 = arith.constant dense<0.000000e+00> : vector<16xf32>
    %103 = vector.multi_reduction <add>, %102, %cst_46 [1] : vector<16x32xf32> to vector<16xf32>
    %104 = vector.shape_cast %103 : vector<16xf32> to vector<16x1xf32>
    %cst_47 = arith.constant 3.200000e+01 : f32
    %105 = vector.broadcast %cst_47 : f32 to vector<16x1xf32>
    %106 = arith.divf %104, %105 : vector<16x1xf32>
    %107 = vector.broadcast %99 : vector<16x1xf32> to vector<16x32xf32>
    %108 = arith.subf %93, %107 : vector<16x32xf32>
    %cst_48 = arith.constant 1.000000e-07 : f32
    %109 = vector.broadcast %cst_48 : f32 to vector<16x1xf32>
    %110 = arith.addf %106, %109 : vector<16x1xf32>
    %111 = math.rsqrt %110 : vector<16x1xf32>
    %112 = vector.broadcast %111 : vector<16x1xf32> to vector<16x32xf32>
    %113 = arith.mulf %108, %112 : vector<16x32xf32>
    %114 = vector.broadcast %94 : vector<1x32xf32> to vector<16x32xf32>
    %115 = arith.mulf %113, %114 : vector<16x32xf32>
    %116 = vector.broadcast %95 : vector<1x32xf32> to vector<16x32xf32>
    %117 = arith.addf %115, %116 : vector<16x32xf32>
    %c488 = arith.constant 488 : index
    %c0_49 = arith.constant 0 : index
    %118 = vector.load %arg2[%c488, %c0_49] : memref<496x128xf32, #tpu.memory_space<vmem>>, vector<2x16xf32>
    %119 = vector.broadcast %1 : vector<1x16xf32> to vector<2x16xf32>
    %120 = arith.mulf %118, %119 : vector<2x16xf32>
    %cst_50 = arith.constant dense<0.000000e+00> : vector<2x32xf32>
    %121 = tpu.matmul %120, %117, %cst_50 {dimension_numbers = #tpu.dot_dimension_numbers<[1], [0], [0], [1], [0, 0, 1, 1], [], []>} : vector<2x16xf32>, vector<16x32xf32>, vector<2x32xf32> -> vector<2x32xf32>
    %cst_51 = arith.constant dense<0.000000e+00> : vector<2xf32>
    %122 = vector.multi_reduction <add>, %120, %cst_51 [1] : vector<2x16xf32> to vector<2xf32>
    %123 = vector.shape_cast %122 : vector<2xf32> to vector<2x1xf32>
    %cst_52 = arith.constant 9.99999971E-10 : f32
    %124 = vector.broadcast %cst_52 : f32 to vector<2x1xf32>
    %125 = arith.maximumf %123, %124 : vector<2x1xf32>
    %126 = tpu.reciprocal %125 {approx = true} : vector<2x1xf32> -> vector<2x1xf32>
    %127 = arith.mulf %125, %126 : vector<2x1xf32>
    %cst_53 = arith.constant 2.000000e+00 : f32
    %128 = vector.broadcast %cst_53 : f32 to vector<2x1xf32>
    %129 = arith.subf %128, %127 : vector<2x1xf32>
    %130 = arith.mulf %126, %129 : vector<2x1xf32>
    %131 = vector.broadcast %130 : vector<2x1xf32> to vector<2x32xf32>
    %132 = arith.mulf %121, %131 : vector<2x32xf32>
    %c224 = arith.constant 224 : index
    %c0_54 = arith.constant 0 : index
    %133 = vector.load %arg2[%c224, %c0_54] : memref<496x128xf32, #tpu.memory_space<vmem>>, vector<32x128xf32>
    %cst_55 = arith.constant dense<0.000000e+00> : vector<2x128xf32>
    %134 = tpu.matmul %132, %133, %cst_55 {dimension_numbers = #tpu.dot_dimension_numbers<[1], [0], [0], [1], [0, 0, 1, 1], [], []>} : vector<2x32xf32>, vector<32x128xf32>, vector<2x128xf32> -> vector<2x128xf32>
    %c256 = arith.constant 256 : index
    %c0_56 = arith.constant 0 : index
    %135 = vector.load %arg2[%c256, %c0_56] : memref<496x128xf32, #tpu.memory_space<vmem>>, vector<1x128xf32>
    %136 = vector.broadcast %135 : vector<1x128xf32> to vector<2x128xf32>
    %137 = arith.addf %134, %136 : vector<2x128xf32>
    %c0_57 = arith.constant 0 : index
    %c0_58 = arith.constant 0 : index
    %138 = vector.load %arg3[%c0_57, %c0_58] : memref<18x128xf32, #tpu.memory_space<vmem>>, vector<16x32xf32>
    tpu.vector_store %arg3[%c0_57, %c0_58], %117 {strides = array<i32>} : memref<18x128xf32, #tpu.memory_space<vmem>>, vector<16x32xf32>,
    %c16 = arith.constant 16 : index
    %c0_59 = arith.constant 0 : index
    %139 = vector.load %arg3[%c16, %c0_59] : memref<18x128xf32, #tpu.memory_space<vmem>>, vector<2x128xf32>
    tpu.vector_store %arg3[%c16, %c0_59], %137 {strides = array<i32>} : memref<18x128xf32, #tpu.memory_space<vmem>>, vector<2x128xf32>,
    return
  }
}

</mosaic_0001>

<llo_original>
// kernel: tpu_custom_call.1
$region0: #{tpu_custom_call.1}
  #allocation0 [shape = 'u32[]', space=smem, size = 0x4, offset = 0x4, fixed_abs, tag = 'smem constant byte address 0x4 - core index']
  #allocation1 [shape = 'u32[72,128]{1,0:T(1,128)}', space=vmem, size = 0x9000, scoped, tag = 'internal scratch']
  %s0 = inlined_call_operand.hbm [shape: f32[16,32], index: 0, kind: input, shape index: {}]
  %s1 = inlined_call_operand.hbm [shape: f32[1,16], index: 1, kind: input, shape index: {}]
  %s2 = inlined_call_operand.hbm [shape: f32[496,128], index: 2, kind: input, shape index: {}]
  %s3 = inlined_call_operand.hbm [shape: f32[18,128], index: 3, kind: output, shape index: {}]
  %s4 = sld [smem:[#allocation0]]
  $region34: #{tpu_custom_call.1} parent=0
    _
  %s6 = ssub.s32 1, %s4
  %s7 = scalar_select 0, %s6, %s4
  $region1: #{tpu_custom_call.1} parent=0
    #allocation2 [shape = 'u8[8192]{0}', space=vmem, size = 0x2000, scoped, tag = 'input window, operand 0, single buffered']
    #allocation3 [shape = 's32[1]{0}', space=sflag, size = 0x4, scoped, tag = 'scoped memory for tpu_custom_call.1']
    #allocation4 [shape = 's32[1]{0}', space=sflag, size = 0x4, scoped, tag = 'scoped memory for tpu_custom_call.1']
    #allocation5 [shape = 'u8[512]{0}', space=vmem, size = 0x400, scoped, tag = 'input window, operand 1, single buffered']
    #allocation6 [shape = 's32[1]{0}', space=sflag, size = 0x4, scoped, tag = 'scoped memory for tpu_custom_call.1']
    #allocation7 [shape = 'u8[253952]{0}', space=vmem, size = 0x3e000, scoped, tag = 'input window, operand 2, single buffered']
    #allocation8 [shape = 'u8[12288]{0}', space=vmem, size = 0x3000, scoped, tag = 'output window, operand 0, single buffered']
    %8 = vsyncpa [#allocation3], 0
    %9 = vsyncpa [#allocation6], 0
    %10 = vsyncpa [#allocation4], 0
    // Predicated region
    $region2: #{tpu_custom_call.1} parent=1 // pred_check
      _
    $region3: #{tpu_custom_call.1} parent=1 // pred_check_branch
      %12 = sbr.rel (0) target = $region5
    $region4: #{tpu_custom_call.1} parent=1 // pred_region
      %14 = vsyncadd [#allocation3], 0
      %s15 = sshll.u32 %s0, 4
      %s16 = int_to_ptr.hbm [resolvable:$true] %s15
      %s17 = sshll.u32 [#allocation2], 4
      %s18 = int_to_ptr.vmem [resolvable:$true] %s17
      %23 = dma.hbm_to_vmem [thread:$0]  %s16, 256, %s18, [#allocation3], 128, 128, 8
    $region5: #{tpu_custom_call.1} parent=1 // pred_fallthru
      _
    // Predicated region
    $region6: #{tpu_custom_call.1} parent=1 // pred_check
      _
    $region7: #{tpu_custom_call.1} parent=1 // pred_check_branch
      %25 = sbr.rel (0) target = $region9
    $region8: #{tpu_custom_call.1} parent=1 // pred_region
      %27 = vsyncadd [#allocation6], 0
      %s29 = sshll.u32 %s1, 4
      %s30 = int_to_ptr.hbm [resolvable:$true] %s29
      %s31 = sshll.u32 [#allocation5], 4
      %s32 = int_to_ptr.vmem [resolvable:$true] %s31
      %34 = dma.hbm_to_vmem [thread:$0]  %s30, 16, %s32, [#allocation6]
    $region9: #{tpu_custom_call.1} parent=1 // pred_fallthru
      _
    // Predicated region
    $region10: #{tpu_custom_call.1} parent=1 // pred_check
      _
    $region11: #{tpu_custom_call.1} parent=1 // pred_check_branch
      %36 = sbr.rel (0) target = $region13
    $region12: #{tpu_custom_call.1} parent=1 // pred_region
      %38 = vsyncadd [#allocation6], 0
      %s39 = sshll.u32 %s2, 4
      %s40 = int_to_ptr.hbm [resolvable:$true] %s39
      %s41 = sshll.u32 [#allocation7], 4
      %s42 = int_to_ptr.vmem [resolvable:$true] %s41
      %47 = dma.hbm_to_vmem [thread:$0]  %s40, 7936, %s42, [#allocation6], 128, 128, 8
    $region13: #{tpu_custom_call.1} parent=1 // pred_fallthru
      _
    // Predicated region
    $region14: #{tpu_custom_call.1} parent=1 // pred_check
      _
    $region15: #{tpu_custom_call.1} parent=1 // pred_check_branch
      %49 = sbr.rel (0) target = $region17
    $region16: #{tpu_custom_call.1} parent=1 // pred_region
      %51 = dma.done [#allocation3], 256
    $region17: #{tpu_custom_call.1} parent=1 // pred_fallthru
      _
    // Predicated region
    $region18: #{tpu_custom_call.1} parent=1 // pred_check
      _
    $region19: #{tpu_custom_call.1} parent=1 // pred_check_branch
      %53 = sbr.rel (0) target = $region21
    $region20: #{tpu_custom_call.1} parent=1 // pred_region
      %55 = dma.done [#allocation6], 16
    $region21: #{tpu_custom_call.1} parent=1 // pred_fallthru
      _
    // Predicated region
    $region22: #{tpu_custom_call.1} parent=1 // pred_check
      _
    $region23: #{tpu_custom_call.1} parent=1 // pred_check_branch
      %57 = sbr.rel (0) target = $region25
    $region24: #{tpu_custom_call.1} parent=1 // pred_region
      %59 = dma.done [#allocation6], 7936
    $region25: #{tpu_custom_call.1} parent=1 // pred_fallthru
      _
    %v60 = vld [vmem:[#allocation2] sm:$0xff]
    %v61 = vld [vmem:[#allocation2 + $0x8] sm:$0xff]
    %v62 = vld [vmem:[#allocation5] sm:$0x1]
    %63 = vst [vmem:[#allocation8] sm:$0xff] 0.0
    %64 = vst [vmem:[#allocation8 + $0x8] sm:$0xff] 0.0
    %65 = vst [vmem:[#allocation8 + $0x10] sm:$0x3] 0.0
    %v66 = vld [vmem:[#allocation7] sm:$0xff]
    %v67 = vld [vmem:[#allocation7 + $0x8] sm:$0xff]
    %v68 = vld [vmem:[#allocation7 + $0x10] sm:$0xff]
    %v69 = vld [vmem:[#allocation7 + $0x18] sm:$0xff]
    %v70 = vld [vmem:[#allocation7 + $0x20] sm:$0x1]
    %v71 = vperm.slane %v70, 0
    %vm72 = vcmask 261120
    %v74 = vsel %vm72, %v60, 0
    %v77 = vsel %vm72, %v61, 0
    %79 = vmatpush.msra.mxu0 0.0
    %80 = vmatpush.msra.mxu0 0.0
    %81 = vmatpush.msra.mxu0 0.0
    %82 = vmatpush.msra.mxu0 0.0
    %83 = vmatpush.msra.mxu0 0.0
    %84 = vmatpush.msra.mxu0 0.0
    %85 = vmatpush.msra.mxu0 0.0
    %86 = vmatpush.msra.mxu0 0.0
    %87 = vmatpush.msra.mxu0 0.0
    %88 = vmatpush.msra.mxu0 0.0
    %89 = vmatpush.msra.mxu0 0.0
    %90 = vmatpush.msra.mxu0 0.0
    %91 = vmatpush.msra.mxu0 %v69
    %92 = vmatpush.msra.mxu0 %v68
    %93 = vmatpush.msra.mxu0 %v67
    %94 = vmatpush.msra.mxu0 %v66
    %95 = vmatmul.f32.gmra.mxu0 %v74
    %v96 = vpop.f32.mrf.mxu0
    %v97 = vadd.f32 %v71, %v96
    %98 = vmatmul.f32.gmra.mxu0 %v77
    %v99 = vpop.f32.mrf.mxu0
    %v100 = vadd.f32 %v71, %v99
    %101 = vdwg.mxu0
    %v102 = vld [vmem:[#allocation7 + $0x108] sm:$0xff]
    %v103 = vld [vmem:[#allocation7 + $0x110] sm:$0xff]
    %v104 = vld [vmem:[#allocation7 + $0x118] sm:$0xff]
    %v105 = vld [vmem:[#allocation7 + $0x120] sm:$0xff]
    %v106 = vld [vmem:[#allocation7 + $0x128] sm:$0xff]
    %v107 = vld [vmem:[#allocation7 + $0x130] sm:$0xff]
    %v108 = vld [vmem:[#allocation7 + $0x138] sm:$0xff]
    %v109 = vld [vmem:[#allocation7 + $0x140] sm:$0xff]
    %v110 = vld [vmem:[#allocation7 + $0x148] sm:$0xff]
    %v111 = vld [vmem:[#allocation7 + $0x150] sm:$0xff]
    %v112 = vld [vmem:[#allocation7 + $0x158] sm:$0xff]
    %v113 = vld [vmem:[#allocation7 + $0x160] sm:$0xff]
    %v114 = vld [vmem:[#allocation7 + $0x168] sm:$0xff]
    %v115 = vld [vmem:[#allocation7 + $0x170] sm:$0xff]
    %v116 = vld [vmem:[#allocation7 + $0x178] sm:$0xff]
    %v117 = vld [vmem:[#allocation7 + $0x180] sm:$0xff]
    %120 = vrot.lane.b32.xlu0 %v97, 96
    %v121 = vpop.permute.xlu0 %120
    %122 = vrot.lane.b32.xlu0 %v100, 96
    %v123 = vpop.permute.xlu0 %122
    %vm126 = vcmask 130048
    %v128 = vsel %vm126, %v102, 0
    %v131 = vsel %vm126, %v103, 0
    %v134 = vsel %vm126, %v104, 0
    %v137 = vsel %vm126, %v105, 0
    %v140 = vsel %vm126, %v106, 0
    %v143 = vsel %vm126, %v107, 0
    %v146 = vsel %vm126, %v108, 0
    %v149 = vsel %vm126, %v109, 0
    %151 = vmatpush.msra.mxu0 0.0
    %152 = vmatpush.msra.mxu0 0.0
    %153 = vmatpush.msra.mxu0 0.0
    %154 = vmatpush.msra.mxu0 0.0
    %155 = vmatpush.msra.mxu0 0.0
    %156 = vmatpush.msra.mxu0 0.0
    %157 = vmatpush.msra.mxu0 0.0
    %158 = vmatpush.msra.mxu0 0.0
    %159 = vmatpush.msra.mxu0 0.0
    %160 = vmatpush.msra.mxu0 0.0
    %161 = vmatpush.msra.mxu0 0.0
    %162 = vmatpush.msra.mxu0 0.0
    %163 = vmatpush.msra.mxu0 0.0
    %164 = vmatpush.msra.mxu0 0.0
    %165 = vmatpush.msra.mxu0 %v123
    %166 = vmatpush.msra.mxu0 %v121
    %167 = vmatmul.f32.gmra.mxu0 %v128
    %v168 = vpop.f32.mrf.mxu0
    %v169 = vadd.f32 0.0, %v168
    %170 = vmatmul.f32.gmra.mxu0 %v131
    %v171 = vpop.f32.mrf.mxu0
    %v172 = vadd.f32 0.0, %v171
    %173 = vmatmul.f32.gmra.mxu0 %v134
    %v174 = vpop.f32.mrf.mxu0
    %v175 = vadd.f32 0.0, %v174
    %176 = vmatmul.f32.gmra.mxu0 %v137
    %v177 = vpop.f32.mrf.mxu0
    %v178 = vadd.f32 0.0, %v177
    %179 = vmatmul.f32.gmra.mxu0 %v140
    %v180 = vpop.f32.mrf.mxu0
    %v181 = vadd.f32 0.0, %v180
    %182 = vmatmul.f32.gmra.mxu0 %v143
    %v183 = vpop.f32.mrf.mxu0
    %v184 = vadd.f32 0.0, %v183
    %185 = vmatmul.f32.gmra.mxu0 %v146
    %v186 = vpop.f32.mrf.mxu0
    %v187 = vadd.f32 0.0, %v186
    %188 = vmatmul.f32.gmra.mxu0 %v149
    %v189 = vpop.f32.mrf.mxu0
    %v190 = vadd.f32 0.0, %v189
    %191 = vdwg.mxu0
    %v192 = vmul.f32 %v169, %v110
    %v193 = vmul.f32 %v172, %v111
    %v194 = vmul.f32 %v175, %v112
    %v195 = vmul.f32 %v178, %v113
    %v196 = vmul.f32 %v181, %v114
    %v197 = vmul.f32 %v184, %v115
    %v198 = vmul.f32 %v187, %v116
    %v199 = vmul.f32 %v190, %v117
    %200 = vrot.lane.b32.xlu0 %v97, 64
    %v201 = vpop.permute.xlu0 %200
    %202 = vrot.lane.b32.xlu0 %v100, 64
    %v203 = vpop.permute.xlu0 %202
    %206 = vmatpush.msra.mxu0 0.0
    %207 = vmatpush.msra.mxu0 0.0
    %208 = vmatpush.msra.mxu0 0.0
    %209 = vmatpush.msra.mxu0 0.0
    %210 = vmatpush.msra.mxu0 0.0
    %211 = vmatpush.msra.mxu0 0.0
    %212 = vmatpush.msra.mxu0 0.0
    %213 = vmatpush.msra.mxu0 0.0
    %214 = vmatpush.msra.mxu0 0.0
    %215 = vmatpush.msra.mxu0 0.0
    %216 = vmatpush.msra.mxu0 0.0
    %217 = vmatpush.msra.mxu0 0.0
    %218 = vmatpush.msra.mxu0 0.0
    %219 = vmatpush.msra.mxu0 0.0
    %220 = vmatpush.msra.mxu0 %v203
    %221 = vmatpush.msra.mxu0 %v201
    %222 = vmatmul.f32.gmra.mxu0 %v128
    %v223 = vpop.f32.mrf.mxu0
    %v224 = vadd.f32 0.0, %v223
    %225 = vmatmul.f32.gmra.mxu0 %v131
    %v226 = vpop.f32.mrf.mxu0
    %v227 = vadd.f32 0.0, %v226
    %228 = vmatmul.f32.gmra.mxu0 %v134
    %v229 = vpop.f32.mrf.mxu0
    %v230 = vadd.f32 0.0, %v229
    %231 = vmatmul.f32.gmra.mxu0 %v137
    %v232 = vpop.f32.mrf.mxu0
    %v233 = vadd.f32 0.0, %v232
    %234 = vmatmul.f32.gmra.mxu0 %v140
    %v235 = vpop.f32.mrf.mxu0
    %v236 = vadd.f32 0.0, %v235
    %237 = vmatmul.f32.gmra.mxu0 %v143
    %v238 = vpop.f32.mrf.mxu0
    %v239 = vadd.f32 0.0, %v238
    %240 = vmatmul.f32.gmra.mxu0 %v146
    %v241 = vpop.f32.mrf.mxu0
    %v242 = vadd.f32 0.0, %v241
    %243 = vmatmul.f32.gmra.mxu0 %v149
    %v244 = vpop.f32.mrf.mxu0
    %v245 = vadd.f32 0.0, %v244
    %246 = vdwg.mxu0
    %v247 = vmul.f32 %v224, %v110
    %v248 = vmul.f32 %v227, %v111
    %v249 = vmul.f32 %v230, %v112
    %v250 = vmul.f32 %v233, %v113
    %v251 = vmul.f32 %v236, %v114
    %v252 = vmul.f32 %v239, %v115
    %v253 = vmul.f32 %v242, %v116
    %v254 = vmul.f32 %v245, %v117
    %v255 = vsel %vm72, %v97, 0
    %v257 = vsel %vm72, %v100, 0
    %v260 = vsel %vm72, %v192, 0
    %v263 = vsel %vm72, %v193, 0
    %v266 = vsel %vm72, %v194, 0
    %v269 = vsel %vm72, %v195, 0
    %v272 = vsel %vm72, %v196, 0
    %v275 = vsel %vm72, %v197, 0
    %v278 = vsel %vm72, %v198, 0
    %v281 = vsel %vm72, %v199, 0
    %283 = vmatpush.xpose.msra.mxu0 0.0
    %284 = vmatpush.xpose.msra.mxu0 0.0
    %285 = vmatpush.xpose.msra.mxu0 0.0
    %286 = vmatpush.xpose.msra.mxu0 0.0
    %287 = vmatpush.xpose.msra.mxu0 0.0
    %288 = vmatpush.xpose.msra.mxu0 0.0
    %289 = vmatpush.xpose.msra.mxu0 0.0
    %290 = vmatpush.xpose.msra.mxu0 0.0
    %291 = vmatpush.xpose.msra.mxu0 %v281
    %292 = vmatpush.xpose.msra.mxu0 %v278
    %293 = vmatpush.xpose.msra.mxu0 %v275
    %294 = vmatpush.xpose.msra.mxu0 %v272
    %295 = vmatpush.xpose.msra.mxu0 %v269
    %296 = vmatpush.xpose.msra.mxu0 %v266
    %297 = vmatpush.xpose.msra.mxu0 %v263
    %298 = vmatpush.xpose.msra.mxu0 %v260
    %299 = vmatmul.f32.gmra.mxu0 %v255
    %v300 = vpop.f32.mrf.mxu0
    %v301 = vadd.f32 0.0, %v300
    %302 = vmatmul.f32.gmra.mxu0 %v257
    %v303 = vpop.f32.mrf.mxu0
    %v304 = vadd.f32 0.0, %v303
    %305 = vdwg.mxu0
    %v306 = vld [vmem:[#allocation7 + $0x1d8] sm:$0xff]
    %v307 = vld [vmem:[#allocation7 + $0x1e0] sm:$0xff]
    %v309 = vsel %vm126, %v62, 0
    %311 = vmatpush.msra.mxu0 0.0
    %312 = vmatpush.msra.mxu0 0.0
    %313 = vmatpush.msra.mxu0 0.0
    %314 = vmatpush.msra.mxu0 0.0
    %315 = vmatpush.msra.mxu0 0.0
    %316 = vmatpush.msra.mxu0 0.0
    %317 = vmatpush.msra.mxu0 0.0
    %318 = vmatpush.msra.mxu0 0.0
    %319 = vmatpush.msra.mxu0 0.0
    %320 = vmatpush.msra.mxu0 0.0
    %321 = vmatpush.msra.mxu0 0.0
    %322 = vmatpush.msra.mxu0 0.0
    %323 = vmatpush.msra.mxu0 0.0
    %324 = vmatpush.msra.mxu0 0.0
    %325 = vmatpush.msra.mxu0 %v307
    %326 = vmatpush.msra.mxu0 %v306
    %327 = vmatmul.f32.gmra.mxu0 %v309
    %v328 = vpop.f32.mrf.mxu0
    %v329 = vadd.f32 0.0, %v328
    %330 = vdwg.mxu0
    %v331 = vld [vmem:[#allocation7 + $0x188] sm:$0xff]
    %v332 = vld [vmem:[#allocation7 + $0x190] sm:$0xff]
    %v333 = vperm.slane %v329, 0
    %v334 = vmul.f32 %v331, %v333
    %v335 = vmul.f32 %v332, %v333
    %vm336 = vcmask 523264
    %v337 = vsel %vm336, %v301, -inf
    %338 = vmax.xlane.f32.xlu0 %v337
    %v339 = vpop.xlane.xlu0 %338
    %v340 = vsel %vm336, %v304, -inf
    %341 = vmax.xlane.f32.xlu0 %v340
    %v342 = vpop.xlane.xlu0 %341
    %v343 = vsub.f32 %v301, %v339
    %v344 = vsub.f32 %v304, %v342
    %v345 = vmul.f32 %v343, 1.442695
    %v346 = vpow.pop %v345
    %v347 = vmul.f32 %v344, 1.442695
    %v348 = vpow.pop %v347
    %v349 = vmul.f32 %v346, %v334
    %v350 = vmul.f32 %v348, %v335
    %v351 = vld [vmem:[#allocation7 + $0x198] sm:$0xff]
    %v352 = vld [vmem:[#allocation7 + $0x1a0] sm:$0xff]
    %v353 = vld [vmem:[#allocation7 + $0x1a8] sm:$0xff]
    %v354 = vld [vmem:[#allocation7 + $0x1b0] sm:$0xff]
    %v355 = vld [vmem:[#allocation7 + $0x1b8] sm:$0xff]
    %v356 = vld [vmem:[#allocation7 + $0x1c0] sm:$0xff]
    %v357 = vld [vmem:[#allocation7 + $0x1c8] sm:$0xff]
    %v358 = vld [vmem:[#allocation7 + $0x1d0] sm:$0xff]
    %v360 = vsel %vm336, %v349, 0
    %v363 = vsel %vm336, %v350, 0
    %365 = vmatpush.msra.mxu0 0.0
    %366 = vmatpush.msra.mxu0 0.0
    %367 = vmatpush.msra.mxu0 0.0
    %368 = vmatpush.msra.mxu0 0.0
    %369 = vmatpush.msra.mxu0 0.0
    %370 = vmatpush.msra.mxu0 0.0
    %371 = vmatpush.msra.mxu0 0.0
    %372 = vmatpush.msra.mxu0 0.0
    %373 = vmatpush.msra.mxu0 %v358
    %374 = vmatpush.msra.mxu0 %v357
    %375 = vmatpush.msra.mxu0 %v356
    %376 = vmatpush.msra.mxu0 %v355
    %377 = vmatpush.msra.mxu0 %v354
    %378 = vmatpush.msra.mxu0 %v353
    %379 = vmatpush.msra.mxu0 %v352
    %380 = vmatpush.msra.mxu0 %v351
    %381 = vmatmul.f32.gmra.mxu0 %v360
    %v382 = vpop.f32.mrf.mxu0
    %v383 = vadd.f32 0.0, %v382
    %384 = vmatmul.f32.gmra.mxu0 %v363
    %v385 = vpop.f32.mrf.mxu0
    %v386 = vadd.f32 0.0, %v385
    %387 = vdwg.mxu0
    %v388 = vrcp.pop %v383
    %v389 = vrcp.pop %v386
    %v390 = vmul.f32 %v383, %v388
    %v391 = vmul.f32 %v386, %v389
    %v392 = vsub.f32 2.0, %v390
    %v393 = vsub.f32 2.0, %v391
    %v394 = vmul.f32 %v388, %v392
    %v395 = vmul.f32 %v389, %v393
    %v396 = vmul.f32 %v349, %v394
    %v397 = vmul.f32 %v350, %v395
    %v399 = vsel %vm336, %v396, 0
    %v402 = vsel %vm336, %v397, 0
    %404 = vmatpush.msra.mxu0 0.0
    %405 = vmatpush.msra.mxu0 0.0
    %406 = vmatpush.msra.mxu0 0.0
    %407 = vmatpush.msra.mxu0 0.0
    %408 = vmatpush.msra.mxu0 0.0
    %409 = vmatpush.msra.mxu0 0.0
    %410 = vmatpush.msra.mxu0 0.0
    %411 = vmatpush.msra.mxu0 0.0
    %412 = vmatpush.msra.mxu0 %v254
    %413 = vmatpush.msra.mxu0 %v253
    %414 = vmatpush.msra.mxu0 %v252
    %415 = vmatpush.msra.mxu0 %v251
    %416 = vmatpush.msra.mxu0 %v250
    %417 = vmatpush.msra.mxu0 %v249
    %418 = vmatpush.msra.mxu0 %v248
    %419 = vmatpush.msra.mxu0 %v247
    %420 = vmatmul.f32.gmra.mxu0 %v399
    %v421 = vpop.f32.mrf.mxu0
    %v422 = vadd.f32 0.0, %v421
    %423 = vmatmul.f32.gmra.mxu0 %v402
    %v424 = vpop.f32.mrf.mxu0
    %v425 = vadd.f32 0.0, %v424
    %426 = vdwg.mxu0
    %v427 = vld [vmem:[#allocation7 + $0x28] sm:$0xff]
    %v428 = vld [vmem:[#allocation7 + $0x30] sm:$0xff]
    %v429 = vld [vmem:[#allocation7 + $0x38] sm:$0xff]
    %v430 = vld [vmem:[#allocation7 + $0x40] sm:$0xff]
    %v431 = vld [vmem:[#allocation7 + $0x48] sm:$0x1]
    %v432 = vperm.slane %v431, 0
    %v434 = vsel %vm72, %v422, 0
    %v437 = vsel %vm72, %v425, 0
    %439 = vmatpush.msra.mxu0 0.0
    %440 = vmatpush.msra.mxu0 0.0
    %441 = vmatpush.msra.mxu0 0.0
    %442 = vmatpush.msra.mxu0 0.0
    %443 = vmatpush.msra.mxu0 0.0
    %444 = vmatpush.msra.mxu0 0.0
    %445 = vmatpush.msra.mxu0 0.0
    %446 = vmatpush.msra.mxu0 0.0
    %447 = vmatpush.msra.mxu0 0.0
    %448 = vmatpush.msra.mxu0 0.0
    %449 = vmatpush.msra.mxu0 0.0
    %450 = vmatpush.msra.mxu0 0.0
    %451 = vmatpush.msra.mxu0 %v430
    %452 = vmatpush.msra.mxu0 %v429
    %453 = vmatpush.msra.mxu0 %v428
    %454 = vmatpush.msra.mxu0 %v427
    %455 = vmatmul.f32.gmra.mxu0 %v434
    %v456 = vpop.f32.mrf.mxu0
    %v457 = vadd.f32 %v432, %v456
    %458 = vmatmul.f32.gmra.mxu0 %v437
    %v459 = vpop.f32.mrf.mxu0
    %v460 = vadd.f32 %v432, %v459
    %461 = vdwg.mxu0
    %v462 = vadd.f32 %v60, %v457
    %v463 = vadd.f32 %v61, %v460
    %v464 = vld [vmem:[#allocation7 + $0x50] sm:$0x1]
    %v465 = vld [vmem:[#allocation7 + $0x58] sm:$0x1]
    %v466 = vsel %vm72, %v462, 0.0
    %467 = vadd.xlane.f32.xlu0 %v466
    %v468 = vpop.xlane.xlu0 %467
    %v469 = vsel %vm72, %v463, 0.0
    %470 = vadd.xlane.f32.xlu0 %v469
    %v471 = vpop.xlane.xlu0 %470
    %v472 = vrcp.pop 32.0
    %v473 = vmul.f32 32.0, %v472
    %v474 = vsub.f32 1.0, %v473
    %v475 = vmul.f32 %v472, %v474
    %v476 = vadd.f32 %v472, %v475
    %vm477 = vweird.f32 %v472
    %v478 = vsel %vm477, %v472, %v476
    %v479 = vmul.f32 %v468, %v478
    %v480 = vmul.f32 %v471, %v478
    %v481 = vsub.f32 %v462, %v479
    %v482 = vsub.f32 %v463, %v480
    %v483 = vmul.f32 %v481, %v481
    %v484 = vmul.f32 %v482, %v482
    %v485 = vsel %vm72, %v483, 0.0
    %486 = vadd.xlane.f32.xlu0 %v485
    %v487 = vpop.xlane.xlu0 %486
    %v488 = vsel %vm72, %v484, 0.0
    %489 = vadd.xlane.f32.xlu0 %v488
    %v490 = vpop.xlane.xlu0 %489
    %v491 = vmul.f32 %v487, %v478
    %v492 = vmul.f32 %v490, %v478
    %v493 = vadd.f32 %v491, 1e-07
    %v494 = vadd.f32 %v492, 1e-07
    %v495 = vrsqrt.pop %v493
    %v496 = vmul.f32 %v495, %v493
    %v497 = vmul.f32 %v496, %v495
    %v498 = vmul.f32 0.5, %v497
    %v499 = vsub.f32 1.5, %v498
    %v500 = vmul.f32 %v495, %v499
    %vm501 = vweird.f32 %v493
    %vm502 = vweird.f32 %v495
    %vm503 = vmor %vm501, %vm502
    %v504 = vsel %vm503, %v495, %v500
    %v505 = vrsqrt.pop %v494
    %v506 = vmul.f32 %v505, %v494
    %v507 = vmul.f32 %v506, %v505
    %v508 = vmul.f32 0.5, %v507
    %v509 = vsub.f32 1.5, %v508
    %v510 = vmul.f32 %v505, %v509
    %vm511 = vweird.f32 %v494
    %vm512 = vweird.f32 %v505
    %vm513 = vmor %vm511, %vm512
    %v514 = vsel %vm513, %v505, %v510
    %v515 = vmul.f32 %v481, %v504
    %v516 = vmul.f32 %v482, %v514
    %v517 = vperm.slane %v464, 0
    %v518 = vmul.f32 %v515, %v517
    %v519 = vmul.f32 %v516, %v517
    %v520 = vperm.slane %v465, 0
    %v521 = vadd.f32 %v518, %v520
    %v522 = vadd.f32 %v519, %v520
    %v523 = vld [vmem:[#allocation7 + $0x60] sm:$0xff]
    %v524 = vld [vmem:[#allocation7 + $0x68] sm:$0xff]
    %v525 = vld [vmem:[#allocation7 + $0x70] sm:$0xff]
    %v526 = vld [vmem:[#allocation7 + $0x78] sm:$0xff]
    %v527 = vld [vmem:[#allocation7 + $0x80] sm:$0x1]
    %v528 = vperm.slane %v527, 0
    %v530 = vsel %vm72, %v521, 0
    %v533 = vsel %vm72, %v522, 0
    %535 = vmatpush.msra.mxu0 0.0
    %536 = vmatpush.msra.mxu0 0.0
    %537 = vmatpush.msra.mxu0 0.0
    %538 = vmatpush.msra.mxu0 0.0
    %539 = vmatpush.msra.mxu0 0.0
    %540 = vmatpush.msra.mxu0 0.0
    %541 = vmatpush.msra.mxu0 0.0
    %542 = vmatpush.msra.mxu0 0.0
    %543 = vmatpush.msra.mxu0 0.0
    %544 = vmatpush.msra.mxu0 0.0
    %545 = vmatpush.msra.mxu0 0.0
    %546 = vmatpush.msra.mxu0 0.0
    %547 = vmatpush.msra.mxu0 %v526
    %548 = vmatpush.msra.mxu0 %v525
    %549 = vmatpush.msra.mxu0 %v524
    %550 = vmatpush.msra.mxu0 %v523
    %551 = vmatmul.f32.gmra.mxu0 %v530
    %v552 = vpop.f32.mrf.mxu0
    %v553 = vadd.f32 %v528, %v552
    %554 = vmatmul.f32.gmra.mxu0 %v533
    %v555 = vpop.f32.mrf.mxu0
    %v556 = vadd.f32 %v528, %v555
    %557 = vdwg.mxu0
    %v558 = vmul.f32 %v553, %v553
    %v559 = vmul.f32 %v556, %v556
    %v560 = vmul.f32 %v553, %v558
    %v561 = vmul.f32 %v556, %v559
    %v562 = vmul.f32 %v560, 0.044715
    %v563 = vmul.f32 %v561, 0.044715
    %v564 = vadd.f32 %v553, %v562
    %v565 = vadd.f32 %v556, %v563
    %v566 = vmul.f32 %v564, 0.7978846
    %v567 = vmul.f32 %v565, 0.7978846
    %v568 = vtanh.pop %v566
    %v569 = vtanh.pop %v567
    %v570 = vadd.f32 %v568, 1.0
    %v571 = vadd.f32 %v569, 1.0
    %v572 = vmul.f32 %v570, 0.5
    %v573 = vmul.f32 %v571, 0.5
    %v574 = vmul.f32 %v553, %v572
    %v575 = vmul.f32 %v556, %v573
    %v576 = vld [vmem:[#allocation7 + $0x88] sm:$0xff]
    %v577 = vld [vmem:[#allocation7 + $0x90] sm:$0xff]
    %v578 = vld [vmem:[#allocation7 + $0x98] sm:$0xff]
    %v579 = vld [vmem:[#allocation7 + $0xa0] sm:$0xff]
    %v580 = vld [vmem:[#allocation7 + $0xa8] sm:$0xff]
    %v581 = vld [vmem:[#allocation7 + $0xb0] sm:$0xff]
    %v582 = vld [vmem:[#allocation7 + $0xb8] sm:$0xff]
    %v583 = vld [vmem:[#allocation7 + $0xc0] sm:$0xff]
    %v584 = vld [vmem:[#allocation7 + $0xc8] sm:$0x1]
    %v585 = vperm.slane %v584, 0
    %v587 = vsel %vm336, %v574, 0
    %v590 = vsel %vm336, %v575, 0
    %592 = vmatpush.msra.mxu0 0.0
    %593 = vmatpush.msra.mxu0 0.0
    %594 = vmatpush.msra.mxu0 0.0
    %595 = vmatpush.msra.mxu0 0.0
    %596 = vmatpush.msra.mxu0 0.0
    %597 = vmatpush.msra.mxu0 0.0
    %598 = vmatpush.msra.mxu0 0.0
    %599 = vmatpush.msra.mxu0 0.0
    %600 = vmatpush.msra.mxu0 %v583
    %601 = vmatpush.msra.mxu0 %v582
    %602 = vmatpush.msra.mxu0 %v581
    %603 = vmatpush.msra.mxu0 %v580
    %604 = vmatpush.msra.mxu0 %v579
    %605 = vmatpush.msra.mxu0 %v578
    %606 = vmatpush.msra.mxu0 %v577
    %607 = vmatpush.msra.mxu0 %v576
    %608 = vmatmul.f32.gmra.mxu0 %v587
    %v609 = vpop.f32.mrf.mxu0
    %v610 = vadd.f32 %v585, %v609
    %611 = vmatmul.f32.gmra.mxu0 %v590
    %v612 = vpop.f32.mrf.mxu0
    %v613 = vadd.f32 %v585, %v612
    %614 = vdwg.mxu0
    %v615 = vadd.f32 %v521, %v610
    %v616 = vadd.f32 %v522, %v613
    %v617 = vld [vmem:[#allocation7 + $0xd0] sm:$0x1]
    %v618 = vld [vmem:[#allocation7 + $0xd8] sm:$0x1]
    %v619 = vsel %vm72, %v615, 0.0
    %620 = vadd.xlane.f32.xlu0 %v619
    %v621 = vpop.xlane.xlu0 %620
    %v622 = vsel %vm72, %v616, 0.0
    %623 = vadd.xlane.f32.xlu0 %v622
    %v624 = vpop.xlane.xlu0 %623
    %v625 = vmul.f32 %v621, %v478
    %v626 = vmul.f32 %v624, %v478
    %v627 = vsub.f32 %v615, %v625
    %v628 = vsub.f32 %v616, %v626
    %v629 = vmul.f32 %v627, %v627
    %v630 = vmul.f32 %v628, %v628
    %v631 = vsel %vm72, %v629, 0.0
    %632 = vadd.xlane.f32.xlu0 %v631
    %v633 = vpop.xlane.xlu0 %632
    %v634 = vsel %vm72, %v630, 0.0
    %635 = vadd.xlane.f32.xlu0 %v634
    %v636 = vpop.xlane.xlu0 %635
    %v637 = vmul.f32 %v633, %v478
    %v638 = vmul.f32 %v636, %v478
    %v639 = vadd.f32 %v637, 1e-07
    %v640 = vadd.f32 %v638, 1e-07
    %v641 = vrsqrt.pop %v639
    %v642 = vmul.f32 %v641, %v639
    %v643 = vmul.f32 %v642, %v641
    %v644 = vmul.f32 0.5, %v643
    %v645 = vsub.f32 1.5, %v644
    %v646 = vmul.f32 %v641, %v645
    %vm647 = vweird.f32 %v639
    %vm648 = vweird.f32 %v641
    %vm649 = vmor %vm647, %vm648
    %v650 = vsel %vm649, %v641, %v646
    %v651 = vrsqrt.pop %v640
    %v652 = vmul.f32 %v651, %v640
    %v653 = vmul.f32 %v652, %v651
    %v654 = vmul.f32 0.5, %v653
    %v655 = vsub.f32 1.5, %v654
    %v656 = vmul.f32 %v651, %v655
    %vm657 = vweird.f32 %v640
    %vm658 = vweird.f32 %v651
    %vm659 = vmor %vm657, %vm658
    %v660 = vsel %vm659, %v651, %v656
    %v661 = vmul.f32 %v627, %v650
    %v662 = vmul.f32 %v628, %v660
    %v663 = vperm.slane %v617, 0
    %v664 = vmul.f32 %v661, %v663
    %v665 = vmul.f32 %v662, %v663
    %v666 = vperm.slane %v618, 0
    %v667 = vadd.f32 %v664, %v666
    %v668 = vadd.f32 %v665, %v666
    %v669 = vld [vmem:[#allocation7 + $0x1e8] sm:$0x3]
    %v670 = vperm.slane %v62, 0
    %v672 = vmul.f32 %v669, %v670
    %v674 = vsel %vm126, %v672, 0
    %676 = vmatpush.msra.mxu0 0.0
    %677 = vmatpush.msra.mxu0 0.0
    %678 = vmatpush.msra.mxu0 0.0
    %679 = vmatpush.msra.mxu0 0.0
    %680 = vmatpush.msra.mxu0 0.0
    %681 = vmatpush.msra.mxu0 0.0
    %682 = vmatpush.msra.mxu0 0.0
    %683 = vmatpush.msra.mxu0 0.0
    %684 = vmatpush.msra.mxu0 0.0
    %685 = vmatpush.msra.mxu0 0.0
    %686 = vmatpush.msra.mxu0 0.0
    %687 = vmatpush.msra.mxu0 0.0
    %688 = vmatpush.msra.mxu0 0.0
    %689 = vmatpush.msra.mxu0 0.0
    %690 = vmatpush.msra.mxu0 %v668
    %691 = vmatpush.msra.mxu0 %v667
    %692 = vmatmul.f32.gmra.mxu0 %v674
    %v693 = vpop.f32.mrf.mxu0
    %v694 = vadd.f32 0.0, %v693
    %695 = vdwg.mxu0
    %vm696 = vcmask 123904
    %v697 = vsel %vm696, %v672, 0.0
    %698 = vadd.xlane.f32.xlu0 %v697
    %v699 = vpop.xlane.xlu0 %698
    %v700 = vmax.f32 %v699, 1e-09
    %v701 = vrcp.pop %v700
    %v702 = vmul.f32 %v700, %v701
    %v703 = vsub.f32 2.0, %v702
    %v704 = vmul.f32 %v701, %v703
    %v705 = vmul.f32 %v694, %v704
    %v706 = vld [vmem:[#allocation7 + $0xe0] sm:$0xff]
    %v707 = vld [vmem:[#allocation7 + $0xe8] sm:$0xff]
    %v708 = vld [vmem:[#allocation7 + $0xf0] sm:$0xff]
    %v709 = vld [vmem:[#allocation7 + $0xf8] sm:$0xff]
    %v710 = vld [vmem:[#allocation7 + $0x100] sm:$0x1]
    %v711 = vperm.slane %v710, 0
    %v713 = vsel %vm72, %v705, 0
    %715 = vmatpush.msra.mxu0 0.0
    %716 = vmatpush.msra.mxu0 0.0
    %717 = vmatpush.msra.mxu0 0.0
    %718 = vmatpush.msra.mxu0 0.0
    %719 = vmatpush.msra.mxu0 0.0
    %720 = vmatpush.msra.mxu0 0.0
    %721 = vmatpush.msra.mxu0 0.0
    %722 = vmatpush.msra.mxu0 0.0
    %723 = vmatpush.msra.mxu0 0.0
    %724 = vmatpush.msra.mxu0 0.0
    %725 = vmatpush.msra.mxu0 0.0
    %726 = vmatpush.msra.mxu0 0.0
    %727 = vmatpush.msra.mxu0 %v709
    %728 = vmatpush.msra.mxu0 %v708
    %729 = vmatpush.msra.mxu0 %v707
    %730 = vmatpush.msra.mxu0 %v706
    %731 = vmatmul.f32.gmra.mxu0 %v713
    %v732 = vpop.f32.mrf.mxu0
    %v733 = vadd.f32 %v711, %v732
    %734 = vdwg.mxu0
    %735 = vst.msk [vmem:[#allocation8] sm:$0xff] %vm72, %v667
    %736 = vst.msk [vmem:[#allocation8 + $0x8] sm:$0xff] %vm72, %v668
    %737 = vst [vmem:[#allocation8 + $0x10] sm:$0x3] %v733
    // Predicated region
    $region26: #{tpu_custom_call.1} parent=1 // pred_check
      _
    $region27: #{tpu_custom_call.1} parent=1 // pred_check_branch
      %739 = sbr.rel (0) target = $region29
    $region28: #{tpu_custom_call.1} parent=1 // pred_region
      %741 = vsyncadd [#allocation4], 0
      %s742 = sshll.u32 [#allocation8], 4
      %s743 = int_to_ptr.vmem [resolvable:$true] %s742
      %s744 = sshll.u32 %s3, 4
      %s745 = int_to_ptr.hbm [resolvable:$true] %s744
      %750 = dma.vmem_to_hbm [thread:$0]  %s743, 384, %s745, [#allocation4], 128, 128, 8
    $region29: #{tpu_custom_call.1} parent=1 // pred_fallthru
      _
    // Predicated region
    $region30: #{tpu_custom_call.1} parent=1 // pred_check
      _
    $region31: #{tpu_custom_call.1} parent=1 // pred_check_branch
      %752 = sbr.rel (0) target = $region33
    $region32: #{tpu_custom_call.1} parent=1 // pred_region
      %754 = dma.done [#allocation4], 384
    $region33: #{tpu_custom_call.1} parent=1 // pred_fallthru
      _
    %755 = vsyncpa [#allocation3], 1
    %756 = vsyncpa [#allocation6], 1
    %757 = vsyncpa [#allocation4], 1

</llo_original>
